<compile_context>
chip_gen: v5e
topology: v5e:2x2
jax: 0.10.0
libtpu: 0.0.40
codegen_flags: <defaults>
</compile_context>

<pallas_src>
import math
import jax
import jax.numpy as jnp
from jax.experimental import pallas as pl
from jax.experimental.pallas import tpu as pltpu


def _round_up(x, m):
    return ((x + m - 1) // m) * m


def mlp_kernel(x_ref, w_fc_ref, b_fc_ref, w_proj_ref, b_proj_ref, o_ref, acc_ref):
    # x_ref:      (tm, C)
    # w_fc_ref:   (C, th)    b_fc_ref:   (1, th)
    # w_proj_ref: (th, C)    b_proj_ref: (1, C)
    # acc_ref:    (tm, C) f32 scratch, resident across the H grid axis.
    hstep = pl.program_id(1)

    @pl.when(hstep == 0)
    def _init():
        acc_ref[...] = jnp.zeros_like(acc_ref)

    x = x_ref[...]  # keep native dtype (bf16 -> bf16 MXU rate), accumulate in f32

    # c_fc block: (tm, th), f32 accumulation on the MXU.
    h = jnp.dot(x, w_fc_ref[...], preferred_element_type=jnp.float32)
    h = h + b_fc_ref[...].astype(jnp.float32)

    # GELU(approximate='tanh'): 0.5*h*(1 + tanh(sqrt(2/pi)*h*(1 + 0.044715*h^2)))
    # (single tanh -> EUP slot; polynomial stays on the VPU)
    c = 0.7978845608028654  # sqrt(2/pi)
    g = 0.5 * h * (1.0 + jnp.tanh(c * h * (1.0 + 0.044715 * h * h)))

    # c_proj partial product for this H block; cast g back to the activation
    # dtype so the second matmul also runs at native MXU rate.
    acc_ref[...] += jnp.dot(g.astype(x_ref.dtype), w_proj_ref[...],
                            preferred_element_type=jnp.float32)

    @pl.when(hstep == pl.num_programs(1) - 1)
    def _finalize():
        y = acc_ref[...] + b_proj_ref[...].astype(jnp.float32)
        o_ref[...] = y.astype(o_ref.dtype)


def mlp_pallas(x, w_fc, b_fc, w_proj, b_proj, *, tm=256, th=512):
    """x: (B, T, C).  w_fc: (C, 4C), b_fc: (4C,), w_proj: (4C, C), b_proj: (C,).

    Weights are stored transposed vs. PyTorch (in_features, out_features) so the
    kernel computes plain x @ W + b on the MXU.
    """
    B, T, C = x.shape
    H = w_fc.shape[1]
    M = B * T

    # --- row tile: large for real workloads, shrunk/padded for tiny demos ---
    if M >= tm:
        tm_eff = tm
    else:
        tm_eff = _round_up(M, 16)  # respects bf16 sublane packing
    M_pad = _round_up(M, tm_eff)

    # --- hidden tile: bound resident weight slices; keep lane dim 128-aligned ---
    if H % th == 0 and th % 128 == 0:
        th_eff = th
    else:
        th_eff = H
    n_h = H // th_eff

    x2 = x.reshape(M, C)
    if M_pad != M:
        x2 = jnp.pad(x2, ((0, M_pad - M), (0, 0)))
    b_fc2 = b_fc.reshape(1, H)
    b_proj2 = b_proj.reshape(1, C)

    itemsize = jnp.dtype(x.dtype).itemsize
    cost = pl.CostEstimate(
        flops=4 * M_pad * C * H,           # two (M,C,H) matmuls
        transcendentals=M_pad * H,          # one tanh per hidden element
        bytes_accessed=(M_pad * C * itemsize                       # x
                        + C * H * jnp.dtype(w_fc.dtype).itemsize    # W_fc
                        + H * C * jnp.dtype(w_proj.dtype).itemsize  # W_proj
                        + H * jnp.dtype(b_fc.dtype).itemsize
                        + C * jnp.dtype(b_proj.dtype).itemsize
                        + M_pad * C * itemsize),                    # y
    )

    out = pl.pallas_call(
        mlp_kernel,
        out_shape=jax.ShapeDtypeStruct((M_pad, C), x.dtype),
        grid_spec=pltpu.PrefetchScalarGridSpec(
            num_scalar_prefetch=0,
            grid=(M_pad // tm_eff, n_h),
            in_specs=[
                pl.BlockSpec((tm_eff, C), lambda i, h: (i, 0)),   # x row tile
                pl.BlockSpec((C, th_eff), lambda i, h: (0, h)),   # W_fc H-slice
                pl.BlockSpec((1, th_eff), lambda i, h: (0, h)),   # b_fc H-slice
                pl.BlockSpec((th_eff, C), lambda i, h: (h, 0)),   # W_proj H-slice
                pl.BlockSpec((1, C), lambda i, h: (0, 0)),        # b_proj
            ],
            out_specs=pl.BlockSpec((tm_eff, C), lambda i, h: (i, 0)),
            scratch_shapes=[pltpu.VMEM((tm_eff, C), jnp.float32)],
        ),
        compiler_params=pltpu.CompilerParams(
            # M axis independent (megacore-shardable on v7x); H axis is a
            # reduction into the scratch accumulator.
            dimension_semantics=("parallel", "arbitrary")),
        cost_estimate=cost,
    )(x2, w_fc, b_fc2, w_proj, b_proj2)

    return out[:M].reshape(B, T, C)


def mlp_reference(x, w_fc, b_fc, w_proj, b_proj):
    h = jnp.einsum("btc,ch->bth", x, w_fc) + b_fc
    c = 0.7978845608028654
    g = 0.5 * h * (1.0 + jnp.tanh(c * (h + 0.044715 * h ** 3)))
    return jnp.einsum("bth,hc->btc", g, w_proj) + b_proj


if __name__ == "__main__":
    # Small config consistent with the module: n_embd=32, hidden=4*32=128.
    B, T, C = 2, 8, 32
    H = 4 * C

    key = jax.random.PRNGKey(0)
    kx, k1, k2, k3, k4 = jax.random.split(key, 5)

    dtype = jnp.bfloat16  # native MXU dtype; kernel accumulates in f32

    x = jax.random.normal(kx, (B, T, C), dtype=jnp.float32).astype(dtype)

    # Deterministic PyTorch-Linear-style uniform init, stored as (in, out).
    bound_fc = 1.0 / math.sqrt(C)
    bound_proj = 1.0 / math.sqrt(H)
    w_fc = jax.random.uniform(k1, (C, H), jnp.float32, -bound_fc, bound_fc).astype(dtype)
    b_fc = jax.random.uniform(k2, (H,), jnp.float32, -bound_fc, bound_fc).astype(dtype)
    w_proj = jax.random.uniform(k3, (H, C), jnp.float32, -bound_proj, bound_proj).astype(dtype)
    b_proj = jax.random.uniform(k4, (C,), jnp.float32, -bound_proj, bound_proj).astype(dtype)

    y = mlp_pallas(x, w_fc, b_fc, w_proj, b_proj)
    jax.block_until_ready(y)

    # f32 reference on the same (bf16-rounded) values.
    y_ref = mlp_reference(x.astype(jnp.float32), w_fc.astype(jnp.float32),
                          b_fc.astype(jnp.float32), w_proj.astype(jnp.float32),
                          b_proj.astype(jnp.float32))

    assert y.shape == (B, T, C)
    assert y.dtype == dtype
    assert jnp.allclose(y.astype(jnp.float32), y_ref, atol=3e-2, rtol=3e-2), \
        "mismatch vs reference"

    print("KERNEL_OK")
</pallas_src>

<mosaic_0001>
module attributes {stable_mosaic.version = 11 : i64} {
  func.func @mlp_kernel(%arg0: i32, %arg1: i32, %arg2: memref<16x32xbf16, #tpu.memory_space<vmem>>, %arg3: memref<32x128xbf16, #tpu.memory_space<vmem>>, %arg4: memref<1x128xbf16, #tpu.memory_space<vmem>>, %arg5: memref<128x32xbf16, #tpu.memory_space<vmem>>, %arg6: memref<1x32xbf16, #tpu.memory_space<vmem>>, %arg7: memref<16x32xbf16, #tpu.memory_space<vmem>>, %arg8: memref<16x32xf32, #tpu.memory_space<vmem>>) attributes {dimension_semantics = [#tpu.dimension_semantics<parallel>, #tpu.dimension_semantics<arbitrary>], iteration_bounds = array<i64: 1, 1>, scalar_prefetch = 0 : i64, scratch_operands = 1 : i64, tpu.core_type = #tpu.core_type<tc>, window_params = [{transform_indices = @transform_0, window_bounds = array<i64: 16, 32>}, {transform_indices = @transform_1, window_bounds = array<i64: 32, 128>}, {transform_indices = @transform_2, window_bounds = array<i64: 1, 128>}, {transform_indices = @transform_3, window_bounds = array<i64: 128, 32>}, {pipeline_mode = #tpu.pipeline_mode<synchronous>, transform_indices = @transform_4, window_bounds = array<i64: 1, 32>}, {transform_indices = @transform_5, window_bounds = array<i64: 16, 32>}]} {
    %c0_i32 = arith.constant 0 : i32
    %0 = arith.cmpi eq, %arg1, %c0_i32 : i32
    %1 = arith.extui %0 : i1 to i32
    %c0_i32_0 = arith.constant 0 : i32
    %2 = arith.cmpi ne, %1, %c0_i32_0 : i32
    scf.if %2 {
      %cst_20 = arith.constant 0.000000e+00 : f32
      %33 = vector.broadcast %cst_20 : f32 to vector<16x32xf32>
      %c0_21 = arith.constant 0 : index
      %c0_22 = arith.constant 0 : index
      %34 = vector.load %arg8[%c0_21, %c0_22] : memref<16x32xf32, #tpu.memory_space<vmem>>, vector<16x32xf32>
      tpu.vector_store %arg8[%c0_21, %c0_22], %33 {strides = array<i32>} : memref<16x32xf32, #tpu.memory_space<vmem>>, vector<16x32xf32>,
    } else {
    }
    %c0 = arith.constant 0 : index
    %c0_1 = arith.constant 0 : index
    %3 = vector.load %arg2[%c0, %c0_1] : memref<16x32xbf16, #tpu.memory_space<vmem>>, vector<16x32xbf16>
    %c0_2 = arith.constant 0 : index
    %c0_3 = arith.constant 0 : index
    %4 = vector.load %arg3[%c0_2, %c0_3] : memref<32x128xbf16, #tpu.memory_space<vmem>>, vector<32x128xbf16>
    %cst = arith.constant dense<0.000000e+00> : vector<16x128xf32>
    %5 = tpu.matmul %3, %4, %cst {dimension_numbers = #tpu.dot_dimension_numbers<[1], [0], [0], [1], [0, 0, 1, 1], [], []>} : vector<16x32xbf16>, vector<32x128xbf16>, vector<16x128xf32> -> vector<16x128xf32>
    %c0_4 = arith.constant 0 : index
    %c0_5 = arith.constant 0 : index
    %6 = vector.load %arg4[%c0_4, %c0_5] : memref<1x128xbf16, #tpu.memory_space<vmem>>, vector<1x128xbf16>
    %7 = arith.extf %6 : vector<1x128xbf16> to vector<1x128xf32>
    %8 = vector.broadcast %7 : vector<1x128xf32> to vector<16x128xf32>
    %9 = arith.addf %5, %8 : vector<16x128xf32>
    %cst_6 = arith.constant 5.000000e-01 : f32
    %10 = vector.broadcast %cst_6 : f32 to vector<16x128xf32>
    %11 = arith.mulf %10, %9 : vector<16x128xf32>
    %cst_7 = arith.constant 0.797884583 : f32
    %12 = vector.broadcast %cst_7 : f32 to vector<16x128xf32>
    %13 = arith.mulf %12, %9 : vector<16x128xf32>
    %cst_8 = arith.constant 4.471500e-02 : f32
    %14 = vector.broadcast %cst_8 : f32 to vector<16x128xf32>
    %15 = arith.mulf %14, %9 : vector<16x128xf32>
    %16 = arith.mulf %15, %9 : vector<16x128xf32>
    %cst_9 = arith.constant 1.000000e+00 : f32
    %17 = vector.broadcast %cst_9 : f32 to vector<16x128xf32>
    %18 = arith.addf %17, %16 : vector<16x128xf32>
    %19 = arith.mulf %13, %18 : vector<16x128xf32>
    %20 = math.tanh %19 : vector<16x128xf32>
    %cst_10 = arith.constant 1.000000e+00 : f32
    %21 = vector.broadcast %cst_10 : f32 to vector<16x128xf32>
    %22 = arith.addf %21, %20 : vector<16x128xf32>
    %23 = arith.mulf %11, %22 : vector<16x128xf32>
    %c0_11 = arith.constant 0 : index
    %c0_12 = arith.constant 0 : index
    %24 = vector.load %arg8[%c0_11, %c0_12] : memref<16x32xf32, #tpu.memory_space<vmem>>, vector<16x32xf32>
    %25 = arith.truncf %23 : vector<16x128xf32> to vector<16x128xbf16>
    %c0_13 = arith.constant 0 : index
    %c0_14 = arith.constant 0 : index
    %26 = vector.load %arg5[%c0_13, %c0_14] : memref<128x32xbf16, #tpu.memory_space<vmem>>, vector<128x32xbf16>
    %cst_15 = arith.constant dense<0.000000e+00> : vector<16x32xf32>
    %27 = tpu.matmul %25, %26, %cst_15 {dimension_numbers = #tpu.dot_dimension_numbers<[1], [0], [0], [1], [0, 0, 1, 1], [], []>} : vector<16x128xbf16>, vector<128x32xbf16>, vector<16x32xf32> -> vector<16x32xf32>
    %28 = arith.addf %24, %27 : vector<16x32xf32>
    %c0_16 = arith.constant 0 : index
    %c0_17 = arith.constant 0 : index
    %29 = vector.load %arg8[%c0_16, %c0_17] : memref<16x32xf32, #tpu.memory_space<vmem>>, vector<16x32xf32>
    tpu.vector_store %arg8[%c0_16, %c0_17], %28 {strides = array<i32>} : memref<16x32xf32, #tpu.memory_space<vmem>>, vector<16x32xf32>,
    %c0_i32_18 = arith.constant 0 : i32
    %30 = arith.cmpi eq, %arg1, %c0_i32_18 : i32
    %31 = arith.extui %30 : i1 to i32
    %c0_i32_19 = arith.constant 0 : i32
    %32 = arith.cmpi ne, %31, %c0_i32_19 : i32
    scf.if %32 {
      %c0_20 = arith.constant 0 : index
      %c0_21 = arith.constant 0 : index
      %33 = vector.load %arg8[%c0_20, %c0_21] : memref<16x32xf32, #tpu.memory_space<vmem>>, vector<16x32xf32>
      %c0_22 = arith.constant 0 : index
      %c0_23 = arith.constant 0 : index
      %34 = vector.load %arg6[%c0_22, %c0_23] : memref<1x32xbf16, #tpu.memory_space<vmem>>, vector<1x32xbf16>
      %35 = arith.extf %34 : vector<1x32xbf16> to vector<1x32xf32>
      %36 = vector.broadcast %35 : vector<1x32xf32> to vector<16x32xf32>
      %37 = arith.addf %33, %36 : vector<16x32xf32>
      %38 = arith.truncf %37 : vector<16x32xf32> to vector<16x32xbf16>
      %c0_24 = arith.constant 0 : index
      %c0_25 = arith.constant 0 : index
      %39 = vector.load %arg7[%c0_24, %c0_25] : memref<16x32xbf16, #tpu.memory_space<vmem>>, vector<16x32xbf16>
      tpu.vector_store %arg7[%c0_24, %c0_25], %38 {strides = array<i32>} : memref<16x32xbf16, #tpu.memory_space<vmem>>, vector<16x32xbf16>,
    } else {
    }
    return
  }
  func.func @transform_0(%arg0: i32, %arg1: i32) -> (i32, i32) {
    %c0_i32 = arith.constant 0 : i32
    %c0_i32_0 = arith.constant 0 : i32
    return %arg0, %c0_i32 : i32, i32
  }
  func.func @transform_1(%arg0: i32, %arg1: i32) -> (i32, i32) {
    %c0_i32 = arith.constant 0 : i32
    %c0_i32_0 = arith.constant 0 : i32
    return %c0_i32, %arg1 : i32, i32
  }
  func.func @transform_2(%arg0: i32, %arg1: i32) -> (i32, i32) {
    %c0_i32 = arith.constant 0 : i32
    %c0_i32_0 = arith.constant 0 : i32
    return %c0_i32, %arg1 : i32, i32
  }
  func.func @transform_3(%arg0: i32, %arg1: i32) -> (i32, i32) {
    %c0_i32 = arith.constant 0 : i32
    %c0_i32_0 = arith.constant 0 : i32
    return %arg1, %c0_i32 : i32, i32
  }
  func.func @transform_4(%arg0: i32, %arg1: i32) -> (i32, i32) {
    %c0_i32 = arith.constant 0 : i32
    %c0_i32_0 = arith.constant 0 : i32
    %c0_i32_1 = arith.constant 0 : i32
    return %c0_i32, %c0_i32_0 : i32, i32
  }
  func.func @transform_5(%arg0: i32, %arg1: i32) -> (i32, i32) {
    %c0_i32 = arith.constant 0 : i32
    %c0_i32_0 = arith.constant 0 : i32
    return %arg0, %c0_i32 : i32, i32
  }
}

</mosaic_0001>

<llo_original>
// kernel: tpu_custom_call.1
$region0: #{tpu_custom_call.1}
  #allocation0 [shape = 'u32[]', space=smem, size = 0x4, offset = 0x4, fixed_abs, tag = 'smem constant byte address 0x4 - core index']
  #allocation1 [shape = 'u32[72,128]{1,0:T(1,128)}', space=vmem, size = 0x9000, scoped, tag = 'internal scratch']
  #allocation2 [shape = 'f32[16,32]{1,0:T(8,128)}', space=vmem, size = 0x2000, scoped, tag = 'scratch operand']
  %s0 = inlined_call_operand.vmem [shape: bf16[16,32], index: 0, kind: input, shape index: {}]
  %s1 = inlined_call_operand.vmem [shape: bf16[32,128], index: 1, kind: input, shape index: {}]
  %s2 = inlined_call_operand.vmem [shape: bf16[1,128], index: 2, kind: input, shape index: {}]
  %s3 = inlined_call_operand.vmem [shape: bf16[128,32], index: 3, kind: input, shape index: {}]
  %s4 = inlined_call_operand.vmem [shape: bf16[1,32], index: 4, kind: input, shape index: {}]
  %s5 = inlined_call_operand.hbm [shape: bf16[16,32], index: 5, kind: output, shape index: {}]
  %s6 = sld [smem:[#allocation0]]
  $region38: #{tpu_custom_call.1} parent=0
    _
  %s8 = ssub.s32 1, %s6
  %s9 = scalar_select 0, %s8, %s6
  $region1: #{tpu_custom_call.1} parent=0
    #allocation3 [shape = 'u8[4096]{0}', space=vmem, size = 0x1000, scoped, tag = 'output window, operand 0, single buffered']
    #allocation4 [shape = 's32[1]{0}', space=sflag, size = 0x4, scoped, tag = 'scoped memory for tpu_custom_call.1']
    %10 = vsyncpa [#allocation4], 0
    // Predicated region
    $region2: #{tpu_custom_call.1} parent=1 // pred_check
      _
    $region3: #{tpu_custom_call.1} parent=1 // pred_check_branch
      %12 = sbr.rel (0) target = $region5
    $region4: #{tpu_custom_call.1} parent=1 // pred_region
      _
    $region5: #{tpu_custom_call.1} parent=1 // pred_fallthru
      _
    // Predicated region
    $region6: #{tpu_custom_call.1} parent=1 // pred_check
      _
    $region7: #{tpu_custom_call.1} parent=1 // pred_check_branch
      %14 = sbr.rel (0) target = $region9
    $region8: #{tpu_custom_call.1} parent=1 // pred_region
      _
    $region9: #{tpu_custom_call.1} parent=1 // pred_fallthru
      _
    // Predicated region
    $region10: #{tpu_custom_call.1} parent=1 // pred_check
      _
    $region11: #{tpu_custom_call.1} parent=1 // pred_check_branch
      %16 = sbr.rel (0) target = $region13
    $region12: #{tpu_custom_call.1} parent=1 // pred_region
      _
    $region13: #{tpu_custom_call.1} parent=1 // pred_fallthru
      _
    // Predicated region
    $region14: #{tpu_custom_call.1} parent=1 // pred_check
      _
    $region15: #{tpu_custom_call.1} parent=1 // pred_check_branch
      %18 = sbr.rel (0) target = $region17
    $region16: #{tpu_custom_call.1} parent=1 // pred_region
      _
    $region17: #{tpu_custom_call.1} parent=1 // pred_fallthru
      _
    // Predicated region
    $region18: #{tpu_custom_call.1} parent=1 // pred_check
      _
    $region19: #{tpu_custom_call.1} parent=1 // pred_check_branch
      %20 = sbr.rel (0) target = $region21
    $region20: #{tpu_custom_call.1} parent=1 // pred_region
      _
    $region21: #{tpu_custom_call.1} parent=1 // pred_fallthru
      _
    %p22 = scmp.eq.s32.totalorder 0, 0
    // Predicated region
    $region22: #{tpu_custom_call.1} parent=1 // pred_check
      %p23 = pneg %p22
    $region23: #{tpu_custom_call.1} parent=1 // pred_check_branch
      %25 = sbr.rel (%p23) target = $region25
    $region24: #{tpu_custom_call.1} parent=1 // pred_region
      %vm26 = vcmask 261120
      %27 = vst.msk [vmem:[#allocation2] sm:$0xff] %vm26, 0.0
      %28 = vst.msk [vmem:[#allocation2 + $0x8] sm:$0xff] %vm26, 0.0
    $region25: #{tpu_custom_call.1} parent=1 // pred_fallthru
      _
    %v29 = vld [vmem:[%s0] sm:$0xf]
    %v30 = vld [vmem:[%s0 + $0x4] sm:$0xf]
    %v31 = vld [vmem:[%s1] sm:$0xf]
    %v32 = vld [vmem:[%s1 + $0x4] sm:$0xf]
    %v33 = vld [vmem:[%s1 + $0x8] sm:$0xf]
    %v34 = vld [vmem:[%s1 + $0xc] sm:$0xf]
    %v35 = vld [vmem:[%s2] sm:$0x1]
    %v36 = vunpack.c.l.bf16 %v35
    %v37 = vperm.slane %v36, 0
    %v40 = vunpack.c.l.b16 %v29
    %v41 = vunpack.c.l.b16 %v30
    %v42 = vpack.c.b16 %v41, %v40
    %v47 = vunpack.c.l.b16 %v31
    %v48 = vunpack.c.l.b16 %v32
    %v49 = vunpack.c.l.b16 %v33
    %v50 = vunpack.c.l.b16 %v34
    %v51 = vpack.c.b16 %v48, %v47
    %v52 = vpack.c.b16 %v50, %v49
    %vm55 = vcmask 261120
    %v57 = vsel %vm55, %v42, 0
    %59 = vmatpush.bf16.msra.mxu0 0
    %60 = vmatpush.bf16.msra.mxu0 0
    %61 = vmatpush.bf16.msra.mxu0 0
    %62 = vmatpush.bf16.msra.mxu0 0
    %63 = vmatpush.bf16.msra.mxu0 0
    %64 = vmatpush.bf16.msra.mxu0 0
    %65 = vmatpush.bf16.msra.mxu0 %v52
    %66 = vmatpush.bf16.msra.mxu0 %v51
    %67 = vmatmul.bf16.gmra.mxu0 %v57
    %v68 = vpop.f32.mrf.mxu0
    %v69 = vadd.f32 %v37, %v68
    %v70 = vpop.f32.mrf.mxu0
    %v71 = vadd.f32 %v37, %v70
    %72 = vdwg.mxu0
    %v73 = vmul.f32 %v69, 0.5
    %v74 = vmul.f32 %v71, 0.5
    %v75 = vmul.f32 %v69, 0.7978846
    %v76 = vmul.f32 %v71, 0.7978846
    %v77 = vmul.f32 %v69, 0.044715
    %v78 = vmul.f32 %v71, 0.044715
    %v79 = vmul.f32 %v77, %v69
    %v80 = vmul.f32 %v78, %v71
    %v81 = vadd.f32 %v79, 1.0
    %v82 = vadd.f32 %v80, 1.0
    %v83 = vmul.f32 %v75, %v81
    %v84 = vmul.f32 %v76, %v82
    %v85 = vtanh.pop %v83
    %v86 = vtanh.pop %v84
    %v87 = vadd.f32 %v85, 1.0
    %v88 = vadd.f32 %v86, 1.0
    %v89 = vmul.f32 %v73, %v87
    %v90 = vmul.f32 %v74, %v88
    %v91 = vld [vmem:[#allocation2] sm:$0xff]
    %v92 = vld [vmem:[#allocation2 + $0x8] sm:$0xff]
    %v93 = vpack.c.bf16 %v90, %v89
    %v94 = vld [vmem:[%s3] sm:$0xf]
    %v95 = vld [vmem:[%s3 + $0x4] sm:$0xf]
    %v96 = vld [vmem:[%s3 + $0x8] sm:$0xf]
    %v97 = vld [vmem:[%s3 + $0xc] sm:$0xf]
    %v98 = vld [vmem:[%s3 + $0x10] sm:$0xf]
    %v99 = vld [vmem:[%s3 + $0x14] sm:$0xf]
    %v100 = vld [vmem:[%s3 + $0x18] sm:$0xf]
    %v101 = vld [vmem:[%s3 + $0x1c] sm:$0xf]
    %v102 = vld [vmem:[%s3 + $0x20] sm:$0xf]
    %v103 = vld [vmem:[%s3 + $0x24] sm:$0xf]
    %v104 = vld [vmem:[%s3 + $0x28] sm:$0xf]
    %v105 = vld [vmem:[%s3 + $0x2c] sm:$0xf]
    %v106 = vld [vmem:[%s3 + $0x30] sm:$0xf]
    %v107 = vld [vmem:[%s3 + $0x34] sm:$0xf]
    %v108 = vld [vmem:[%s3 + $0x38] sm:$0xf]
    %v109 = vld [vmem:[%s3 + $0x3c] sm:$0xf]
    %v126 = vunpack.c.l.b16 %v94
    %v127 = vunpack.c.l.b16 %v95
    %v128 = vunpack.c.l.b16 %v96
    %v129 = vunpack.c.l.b16 %v97
    %v130 = vunpack.c.l.b16 %v98
    %v131 = vunpack.c.l.b16 %v99
    %v132 = vunpack.c.l.b16 %v100
    %v133 = vunpack.c.l.b16 %v101
    %v134 = vunpack.c.l.b16 %v102
    %v135 = vunpack.c.l.b16 %v103
    %v136 = vunpack.c.l.b16 %v104
    %v137 = vunpack.c.l.b16 %v105
    %v138 = vunpack.c.l.b16 %v106
    %v139 = vunpack.c.l.b16 %v107
    %v140 = vunpack.c.l.b16 %v108
    %v141 = vunpack.c.l.b16 %v109
    %v142 = vpack.c.b16 %v127, %v126
    %v143 = vpack.c.b16 %v129, %v128
    %v144 = vpack.c.b16 %v131, %v130
    %v145 = vpack.c.b16 %v133, %v132
    %v146 = vpack.c.b16 %v135, %v134
    %v147 = vpack.c.b16 %v137, %v136
    %v148 = vpack.c.b16 %v139, %v138
    %v149 = vpack.c.b16 %v141, %v140
    %158 = vmatpush.bf16.msra.mxu0 %v149
    %159 = vmatpush.bf16.msra.mxu0 %v148
    %160 = vmatpush.bf16.msra.mxu0 %v147
    %161 = vmatpush.bf16.msra.mxu0 %v146
    %162 = vmatpush.bf16.msra.mxu0 %v145
    %163 = vmatpush.bf16.msra.mxu0 %v144
    %164 = vmatpush.bf16.msra.mxu0 %v143
    %165 = vmatpush.bf16.msra.mxu0 %v142
    %166 = vmatmul.bf16.gmra.mxu0 %v93
    %v167 = vpop.f32.mrf.mxu0
    %v168 = vadd.f32 0.0, %v167
    %v169 = vpop.f32.mrf.mxu0
    %v170 = vadd.f32 0.0, %v169
    %171 = vdwg.mxu0
    %v172 = vadd.f32 %v91, %v168
    %v173 = vadd.f32 %v92, %v170
    %174 = vst.msk [vmem:[#allocation2] sm:$0xff] %vm55, %v172
    %175 = vst.msk [vmem:[#allocation2 + $0x8] sm:$0xff] %vm55, %v173
    // Predicated region
    $region26: #{tpu_custom_call.1} parent=1 // pred_check
      %p176 = pneg %p22
    $region27: #{tpu_custom_call.1} parent=1 // pred_check_branch
      %178 = sbr.rel (%p176) target = $region29
    $region28: #{tpu_custom_call.1} parent=1 // pred_region
      %v179 = vld [vmem:[#allocation2] sm:$0xff]
      %v180 = vld [vmem:[#allocation2 + $0x8] sm:$0xff]
      %v181 = vld [vmem:[%s4] sm:$0x1]
      %v182 = vunpack.c.l.bf16 %v181
      %v183 = vperm.slane %v182, 0
      %v184 = vadd.f32 %v179, %v183
      %v185 = vadd.f32 %v180, %v183
      %v186 = vpack.c.bf16 %v184, %v184
      %v187 = vpack.c.bf16 %v185, %v185
      %vm188 = vcmask 257024
      %189 = vst.msk [vmem:[#allocation3] sm:$0xf] %vm188, %v186
      %190 = vst.msk [vmem:[#allocation3 + $0x4] sm:$0xf] %vm188, %v187
    $region29: #{tpu_custom_call.1} parent=1 // pred_fallthru
      _
    // Predicated region
    $region30: #{tpu_custom_call.1} parent=1 // pred_check
      _
    $region31: #{tpu_custom_call.1} parent=1 // pred_check_branch
      %192 = sbr.rel (0) target = $region33
    $region32: #{tpu_custom_call.1} parent=1 // pred_region
      %194 = vsyncadd [#allocation4], 0
      %s195 = sshll.u32 [#allocation3], 4
      %s196 = int_to_ptr.vmem [resolvable:$true] %s195
      %s197 = sshll.u32 %s5, 4
      %s198 = int_to_ptr.hbm [resolvable:$true] %s197
      %203 = dma.vmem_to_hbm [thread:$0]  %s196, 128, %s198, [#allocation4], 64, 64, 4
    $region33: #{tpu_custom_call.1} parent=1 // pred_fallthru
      _
    // Predicated region
    $region34: #{tpu_custom_call.1} parent=1 // pred_check
      _
    $region35: #{tpu_custom_call.1} parent=1 // pred_check_branch
      %205 = sbr.rel (0) target = $region37
    $region36: #{tpu_custom_call.1} parent=1 // pred_region
      %207 = dma.done [#allocation4], 128
    $region37: #{tpu_custom_call.1} parent=1 // pred_fallthru
      _
    %208 = vsyncpa [#allocation4], 1

</llo_original>
